<compile_context>
chip_gen: v6e
topology: v6e:2x2x1
jax: 0.10.0
libtpu: 0.0.40
codegen_flags: <defaults>
</compile_context>

<pallas_src>
import functools

import jax
import jax.numpy as jnp
from jax.experimental import pallas as pl
from jax.experimental.pallas import tpu as pltpu

HIDDEN = 256          # per-branch hidden width
HIDDEN2 = 2 * HIDDEN  # fused (actor ++ critic) width = 512
OUT_PAD = 128         # lane-dense padded output width (probs + value + zero pad)


def _round_up(x, m):
    return ((x + m - 1) // m) * m


def _agent_kernel(x_ref, w12_ref, w3_ref, b_ref, out_ref, *, in_pad, num_actions):
    wdt = w12_ref.dtype                                       # bf16 (or f32 fallback)
    x = x_ref[...].astype(wdt)                                # (TB, in_pad)

    # Static, tile-aligned views into the packed weight slab (free, no copies).
    w1 = w12_ref[0:in_pad, :]                                 # (in_pad, 512) = [aw1 | cw1]
    w2a = w12_ref[in_pad:in_pad + HIDDEN, 0:HIDDEN]           # (256, 256)    = aw2
    w2c = w12_ref[in_pad:in_pad + HIDDEN, HIDDEN:]            # (256, 256)    = cw2

    # Layer 1: actor ++ critic fused along the output dim (one MXU pass, f32 acc).
    h1 = jnp.tanh(jnp.dot(x, w1, preferred_element_type=jnp.float32)
                  + b_ref[0:1, :])                            # (TB, 512) f32

    # Layer 2: split into two 256x256 dots -> no zero-block MACs.
    h1a = h1[:, 0:HIDDEN].astype(wdt)
    h1c = h1[:, HIDDEN:].astype(wdt)
    h2a = jnp.tanh(jnp.dot(h1a, w2a, preferred_element_type=jnp.float32)
                   + b_ref[1:2, 0:HIDDEN]).astype(wdt)        # (TB, 256)
    h2c = jnp.tanh(jnp.dot(h1c, w2c, preferred_element_type=jnp.float32)
                   + b_ref[1:2, HIDDEN:]).astype(wdt)         # (TB, 256)

    # Layer 3: lanes [0:A) = actor logits, lane A = critic value, rest zero.
    z = (jnp.dot(h2a, w3_ref[0:HIDDEN, :], preferred_element_type=jnp.float32)
         + jnp.dot(h2c, w3_ref[HIDDEN:, :], preferred_element_type=jnp.float32)
         + b_ref[2:3, 0:OUT_PAD])                             # (TB, 128) f32

    lane = jax.lax.broadcasted_iota(jnp.int32, z.shape, 1)
    is_actor = lane < num_actions

    # Masked, numerically-stable softmax over the actor lanes only.
    logits = jnp.where(is_actor, z, jnp.float32(-1e30))
    m = jnp.max(logits, axis=-1, keepdims=True)
    e = jnp.exp(logits - m)                                   # padded lanes -> 0
    s = jnp.sum(e, axis=-1, keepdims=True)
    # EUP approximate reciprocal (free slot) + 2 Newton-Raphson steps -> f32 accuracy.
    r = pl.reciprocal(s, approx=True)
    r = r * (2.0 - s * r)
    r = r * (2.0 - s * r)
    probs = e * r

    # Single lane-dense store: probs in [0:A), value at lane A, zeros elsewhere.
    out_ref[...] = jnp.where(is_actor, probs,
                             jnp.where(lane == num_actions, z, jnp.float32(0.0)))


def pack_params(params, in_features, num_actions, dtype=jnp.bfloat16):
    """Pack the 12 Linear params into 3 contiguous, (8,128)-tile-aligned arrays.

    w12 slab: rows [0:in_pad)           -> [aw1 | cw1]            (lane-concat)
              rows [in_pad:in_pad+256)  -> [aw2 | cw2]            (side by side)
    w3:       rows [0:256) cols [0:A)   -> aw3 ; rows [256:) col A -> cw3
    b (f32):  row 0 [ab1|cb1], row 1 [ab2|cb2], row 2 [ab3, cb3 @ lane A]
    """
    assert num_actions + 1 <= OUT_PAD
    in_pad = _round_up(max(in_features, 8), 8)

    w12 = jnp.zeros((in_pad + HIDDEN, HIDDEN2), jnp.float32)
    w12 = w12.at[:in_features, :HIDDEN].set(params["aw1"])
    w12 = w12.at[:in_features, HIDDEN:].set(params["cw1"])
    w12 = w12.at[in_pad:in_pad + HIDDEN, :HIDDEN].set(params["aw2"])
    w12 = w12.at[in_pad:in_pad + HIDDEN, HIDDEN:].set(params["cw2"])
    w12 = w12.astype(dtype)

    w3 = jnp.zeros((HIDDEN2, OUT_PAD), jnp.float32)
    w3 = w3.at[:HIDDEN, :num_actions].set(params["aw3"])
    w3 = w3.at[HIDDEN:, num_actions:num_actions + 1].set(params["cw3"])
    w3 = w3.astype(dtype)

    b = jnp.zeros((3, HIDDEN2), jnp.float32)
    b = b.at[0, :HIDDEN].set(params["ab1"][0])
    b = b.at[0, HIDDEN:].set(params["cb1"][0])
    b = b.at[1, :HIDDEN].set(params["ab2"][0])
    b = b.at[1, HIDDEN:].set(params["cb2"][0])
    b = b.at[2, :num_actions].set(params["ab3"][0])
    b = b.at[2, num_actions].set(params["cb3"][0, 0])

    return dict(w12=w12, w3=w3, b=b, in_pad=in_pad, num_actions=num_actions)


@functools.partial(jax.jit, static_argnames=("in_pad", "num_actions"))
def _forward_impl(x, w12, w3, b, *, in_pad, num_actions):
    x = x.astype(jnp.float32)
    B, in_features = x.shape

    B_pad = _round_up(max(B, 8), 8)
    if B_pad >= 256:
        # >= 2 grid steps so the "parallel" batch axis shards across both v7x
        # TensorCores; tile capped at 1024 rows (per-step overhead << 1%, VMEM tiny).
        TB = min(1024, _round_up(-(-B_pad // 2), 8))
    else:
        TB = B_pad
    B_pad = _round_up(B_pad, TB)

    # Pad fuses into this jit: no separate dispatch / extra HBM round trip.
    x_pad = jnp.pad(x, ((0, B_pad - B), (0, in_pad - in_features)))

    kernel = functools.partial(_agent_kernel, in_pad=in_pad, num_actions=num_actions)
    out = pl.pallas_call(
        kernel,
        out_shape=jax.ShapeDtypeStruct((B_pad, OUT_PAD), jnp.float32),
        grid=(B_pad // TB,),
        in_specs=[
            pl.BlockSpec((TB, in_pad), lambda i: (i, 0)),                 # x tile
            pl.BlockSpec((in_pad + HIDDEN, HIDDEN2), lambda i: (0, 0)),   # W1/W2 slab
            pl.BlockSpec((HIDDEN2, OUT_PAD), lambda i: (0, 0)),           # W3 (packed)
            pl.BlockSpec((3, HIDDEN2), lambda i: (0, 0)),                 # bias slab
        ],
        out_specs=pl.BlockSpec((TB, OUT_PAD), lambda i: (i, 0)),
        compiler_params=pltpu.CompilerParams(
            dimension_semantics=("parallel",)),
    )(x_pad, w12, w3, b)

    # Slices are fused into this jit; consumers that want zero extra work can
    # instead read the packed (B, 128) slab directly.
    probs = out[:B, :num_actions]
    value = out[:B, num_actions]     # PyTorch: self.critic(obs).squeeze()
    return probs, value


def agent_forward(x, packed):
    """Returns (probs, value). probs: (B, num_actions); value: (B,)."""
    return _forward_impl(x, packed["w12"], packed["w3"], packed["b"],
                         in_pad=packed["in_pad"],
                         num_actions=packed["num_actions"])


def init_params(key, in_features, num_actions):
    """Linear weights ~ N(0, 1) (per the module's _init_weights); biases use the
    PyTorch default U(-1/sqrt(fan_in), 1/sqrt(fan_in)). Stored transposed: (in, out)."""
    ks = jax.random.split(key, 12)

    def lin(kw, kb, fan_in, fan_out):
        w = jax.random.normal(kw, (fan_in, fan_out), dtype=jnp.float32)
        bound = 1.0 / jnp.sqrt(jnp.float32(fan_in))
        b = jax.random.uniform(kb, (1, fan_out), dtype=jnp.float32,
                               minval=-bound, maxval=bound)
        return w, b

    aw1, ab1 = lin(ks[0], ks[1], in_features, HIDDEN)
    aw2, ab2 = lin(ks[2], ks[3], HIDDEN, HIDDEN)
    aw3, ab3 = lin(ks[4], ks[5], HIDDEN, num_actions)
    cw1, cb1 = lin(ks[6], ks[7], in_features, HIDDEN)
    cw2, cb2 = lin(ks[8], ks[9], HIDDEN, HIDDEN)
    cw3, cb3 = lin(ks[10], ks[11], HIDDEN, 1)
    return dict(aw1=aw1, ab1=ab1, aw2=aw2, ab2=ab2, aw3=aw3, ab3=ab3,
                cw1=cw1, cb1=cb1, cw2=cw2, cb2=cb2, cw3=cw3, cb3=cb3)


def _reference_forward(x, p):
    """Pure-JAX reference with the SAME numerics as the kernel:
    bf16 matmul operands, f32 accumulation, f32 biases / tanh / softmax."""
    bf = jnp.bfloat16

    def mm(a, w):
        return jnp.dot(a.astype(bf), w.astype(bf),
                       preferred_element_type=jnp.float32)

    h = jnp.tanh(mm(x, p["aw1"]) + p["ab1"])
    h = jnp.tanh(mm(h, p["aw2"]) + p["ab2"])
    logits = mm(h, p["aw3"]) + p["ab3"]
    probs = jax.nn.softmax(logits, axis=-1)

    g = jnp.tanh(mm(x, p["cw1"]) + p["cb1"])
    g = jnp.tanh(mm(g, p["cw2"]) + p["cb2"])
    val = jnp.squeeze(mm(g, p["cw3"]) + p["cb3"], axis=-1)
    return probs, val


if __name__ == "__main__":
    key = jax.random.PRNGKey(0)
    k_x, k_p = jax.random.split(key)

    batch, in_features, num_actions = 8, 32, 4
    x = jax.random.normal(k_x, (batch, in_features), dtype=jnp.float32)
    params = init_params(k_p, in_features, num_actions)
    packed = pack_params(params, in_features, num_actions)

    probs, value = agent_forward(x, packed)
    probs, value = jax.block_until_ready((probs, value))

    ref_probs, ref_value = _reference_forward(x, params)

    assert probs.shape == (batch, num_actions)
    assert value.shape == (batch,)
    # probs is a valid categorical distribution (NR-refined normalization).
    assert bool(jnp.all(probs >= 0.0))
    assert jnp.allclose(jnp.sum(probs, axis=-1), 1.0, atol=1e-3)
    # Compare against the bf16-operand / f32-accumulate reference.  Tolerances
    # allow for accumulation-order / transcendental-implementation differences
    # amplified through the saturating tanh stack (N(0,1) weights -> logit std
    # ~16, near-one-hot softmax), while still catching any real packing/mask bug.
    assert jnp.allclose(probs, ref_probs, atol=3e-2, rtol=3e-2)
    assert jnp.allclose(value, ref_value, atol=1e-1, rtol=3e-2)

    print("KERNEL_OK")
</pallas_src>

<mosaic_0001>
module attributes {stable_mosaic.version = 11 : i64} {
  func.func @_agent_kernel(%arg0: i32, %arg1: memref<8x32xf32, #tpu.memory_space<vmem>>, %arg2: memref<288x512xbf16, #tpu.memory_space<vmem>>, %arg3: memref<512x128xbf16, #tpu.memory_space<vmem>>, %arg4: memref<3x512xf32, #tpu.memory_space<vmem>>, %arg5: memref<8x128xf32, #tpu.memory_space<vmem>>) attributes {dimension_semantics = [#tpu.dimension_semantics<parallel>], iteration_bounds = array<i64: 1>, scalar_prefetch = 0 : i64, scratch_operands = 0 : i64, tpu.core_type = #tpu.core_type<tc>, window_params = [{transform_indices = @transform_0, window_bounds = array<i64: 8, 32>}, {pipeline_mode = #tpu.pipeline_mode<synchronous>, transform_indices = @transform_1, window_bounds = array<i64: 288, 512>}, {pipeline_mode = #tpu.pipeline_mode<synchronous>, transform_indices = @transform_2, window_bounds = array<i64: 512, 128>}, {pipeline_mode = #tpu.pipeline_mode<synchronous>, transform_indices = @transform_3, window_bounds = array<i64: 3, 512>}, {transform_indices = @transform_4, window_bounds = array<i64: 8, 128>}]} {
    %c0 = arith.constant 0 : index
    %c0_0 = arith.constant 0 : index
    %0 = vector.load %arg1[%c0, %c0_0] : memref<8x32xf32, #tpu.memory_space<vmem>>, vector<8x32xf32>
    %1 = arith.truncf %0 : vector<8x32xf32> to vector<8x32xbf16>
    %c0_1 = arith.constant 0 : index
    %c0_2 = arith.constant 0 : index
    %2 = vector.load %arg2[%c0_1, %c0_2] : memref<288x512xbf16, #tpu.memory_space<vmem>>, vector<32x512xbf16>
    %c32 = arith.constant 32 : index
    %c0_3 = arith.constant 0 : index
    %3 = vector.load %arg2[%c32, %c0_3] : memref<288x512xbf16, #tpu.memory_space<vmem>>, vector<256x256xbf16>
    %c32_4 = arith.constant 32 : index
    %c256 = arith.constant 256 : index
    %4 = vector.load %arg2[%c32_4, %c256] : memref<288x512xbf16, #tpu.memory_space<vmem>>, vector<256x256xbf16>
    %cst = arith.constant dense<0.000000e+00> : vector<8x512xf32>
    %5 = tpu.matmul %1, %2, %cst {dimension_numbers = #tpu.dot_dimension_numbers<[1], [0], [0], [1], [0, 0, 1, 1], [], []>} : vector<8x32xbf16>, vector<32x512xbf16>, vector<8x512xf32> -> vector<8x512xf32>
    %c0_5 = arith.constant 0 : index
    %c0_6 = arith.constant 0 : index
    %6 = vector.load %arg4[%c0_5, %c0_6] : memref<3x512xf32, #tpu.memory_space<vmem>>, vector<1x512xf32>
    %7 = vector.broadcast %6 : vector<1x512xf32> to vector<8x512xf32>
    %8 = arith.addf %5, %7 : vector<8x512xf32>
    %9 = math.tanh %8 : vector<8x512xf32>
    %10 = vector.extract_strided_slice %9 {offsets = [0, 0], sizes = [8, 256], strides = [1, 1]} : vector<8x512xf32> to vector<8x256xf32>
    %11 = arith.truncf %10 : vector<8x256xf32> to vector<8x256xbf16>
    %12 = vector.extract_strided_slice %9 {offsets = [0, 256], sizes = [8, 256], strides = [1, 1]} : vector<8x512xf32> to vector<8x256xf32>
    %13 = arith.truncf %12 : vector<8x256xf32> to vector<8x256xbf16>
    %cst_7 = arith.constant dense<0.000000e+00> : vector<8x256xf32>
    %14 = tpu.matmul %11, %3, %cst_7 {dimension_numbers = #tpu.dot_dimension_numbers<[1], [0], [0], [1], [0, 0, 1, 1], [], []>} : vector<8x256xbf16>, vector<256x256xbf16>, vector<8x256xf32> -> vector<8x256xf32>
    %c1 = arith.constant 1 : index
    %c0_8 = arith.constant 0 : index
    %15 = vector.load %arg4[%c1, %c0_8] : memref<3x512xf32, #tpu.memory_space<vmem>>, vector<1x256xf32>
    %16 = vector.broadcast %15 : vector<1x256xf32> to vector<8x256xf32>
    %17 = arith.addf %14, %16 : vector<8x256xf32>
    %18 = math.tanh %17 : vector<8x256xf32>
    %19 = arith.truncf %18 : vector<8x256xf32> to vector<8x256xbf16>
    %cst_9 = arith.constant dense<0.000000e+00> : vector<8x256xf32>
    %20 = tpu.matmul %13, %4, %cst_9 {dimension_numbers = #tpu.dot_dimension_numbers<[1], [0], [0], [1], [0, 0, 1, 1], [], []>} : vector<8x256xbf16>, vector<256x256xbf16>, vector<8x256xf32> -> vector<8x256xf32>
    %c1_10 = arith.constant 1 : index
    %c256_11 = arith.constant 256 : index
    %21 = vector.load %arg4[%c1_10, %c256_11] : memref<3x512xf32, #tpu.memory_space<vmem>>, vector<1x256xf32>
    %22 = vector.broadcast %21 : vector<1x256xf32> to vector<8x256xf32>
    %23 = arith.addf %20, %22 : vector<8x256xf32>
    %24 = math.tanh %23 : vector<8x256xf32>
    %25 = arith.truncf %24 : vector<8x256xf32> to vector<8x256xbf16>
    %c0_12 = arith.constant 0 : index
    %c0_13 = arith.constant 0 : index
    %26 = vector.load %arg3[%c0_12, %c0_13] : memref<512x128xbf16, #tpu.memory_space<vmem>>, vector<256x128xbf16>
    %cst_14 = arith.constant dense<0.000000e+00> : vector<8x128xf32>
    %27 = tpu.matmul %19, %26, %cst_14 {dimension_numbers = #tpu.dot_dimension_numbers<[1], [0], [0], [1], [0, 0, 1, 1], [], []>} : vector<8x256xbf16>, vector<256x128xbf16>, vector<8x128xf32> -> vector<8x128xf32>
    %c256_15 = arith.constant 256 : index
    %c0_16 = arith.constant 0 : index
    %28 = vector.load %arg3[%c256_15, %c0_16] : memref<512x128xbf16, #tpu.memory_space<vmem>>, vector<256x128xbf16>
    %cst_17 = arith.constant dense<0.000000e+00> : vector<8x128xf32>
    %29 = tpu.matmul %25, %28, %cst_17 {dimension_numbers = #tpu.dot_dimension_numbers<[1], [0], [0], [1], [0, 0, 1, 1], [], []>} : vector<8x256xbf16>, vector<256x128xbf16>, vector<8x128xf32> -> vector<8x128xf32>
    %30 = arith.addf %27, %29 : vector<8x128xf32>
    %c2 = arith.constant 2 : index
    %c0_18 = arith.constant 0 : index
    %31 = vector.load %arg4[%c2, %c0_18] : memref<3x512xf32, #tpu.memory_space<vmem>>, vector<1x128xf32>
    %32 = vector.broadcast %31 : vector<1x128xf32> to vector<8x128xf32>
    %33 = arith.addf %30, %32 : vector<8x128xf32>
    %34 = tpu.iota {dimensions = array<i32: 1>} : vector<8x128xi32>
    %c4_i32 = arith.constant 4 : i32
    %35 = vector.broadcast %c4_i32 : i32 to vector<8x128xi32>
    %36 = arith.cmpi slt, %34, %35 : vector<8x128xi32>
    %cst_19 = arith.constant -1.000000e+30 : f32
    %37 = vector.broadcast %cst_19 : f32 to vector<8x128xf32>
    %38 = arith.select %36, %33, %37 : vector<8x128xi1>, vector<8x128xf32>
    %cst_20 = arith.constant dense<0xFF800000> : vector<8xf32>
    %39 = vector.multi_reduction <maximumf>, %38, %cst_20 [1] : vector<8x128xf32> to vector<8xf32>
    %40 = vector.shape_cast %39 : vector<8xf32> to vector<8x1xf32>
    %41 = vector.broadcast %40 : vector<8x1xf32> to vector<8x128xf32>
    %42 = arith.subf %38, %41 : vector<8x128xf32>
    %43 = math.exp %42 : vector<8x128xf32>
    %cst_21 = arith.constant dense<0.000000e+00> : vector<8xf32>
    %44 = vector.multi_reduction <add>, %43, %cst_21 [1] : vector<8x128xf32> to vector<8xf32>
    %45 = vector.shape_cast %44 : vector<8xf32> to vector<8x1xf32>
    %46 = tpu.reciprocal %45 {approx = true} : vector<8x1xf32> -> vector<8x1xf32>
    %47 = arith.mulf %45, %46 : vector<8x1xf32>
    %cst_22 = arith.constant 2.000000e+00 : f32
    %48 = vector.broadcast %cst_22 : f32 to vector<8x1xf32>
    %49 = arith.subf %48, %47 : vector<8x1xf32>
    %50 = arith.mulf %46, %49 : vector<8x1xf32>
    %51 = arith.mulf %45, %50 : vector<8x1xf32>
    %cst_23 = arith.constant 2.000000e+00 : f32
    %52 = vector.broadcast %cst_23 : f32 to vector<8x1xf32>
    %53 = arith.subf %52, %51 : vector<8x1xf32>
    %54 = arith.mulf %50, %53 : vector<8x1xf32>
    %55 = vector.broadcast %54 : vector<8x1xf32> to vector<8x128xf32>
    %56 = arith.mulf %43, %55 : vector<8x128xf32>
    %c4_i32_24 = arith.constant 4 : i32
    %57 = vector.broadcast %c4_i32_24 : i32 to vector<8x128xi32>
    %58 = arith.cmpi eq, %34, %57 : vector<8x128xi32>
    %cst_25 = arith.constant 0.000000e+00 : f32
    %59 = vector.broadcast %cst_25 : f32 to vector<8x128xf32>
    %60 = arith.select %58, %33, %59 : vector<8x128xi1>, vector<8x128xf32>
    %61 = arith.select %36, %56, %60 : vector<8x128xi1>, vector<8x128xf32>
    %c0_26 = arith.constant 0 : index
    %c0_27 = arith.constant 0 : index
    %62 = vector.load %arg5[%c0_26, %c0_27] : memref<8x128xf32, #tpu.memory_space<vmem>>, vector<8x128xf32>
    tpu.vector_store %arg5[%c0_26, %c0_27], %61 {strides = array<i32>} : memref<8x128xf32, #tpu.memory_space<vmem>>, vector<8x128xf32>,
    return
  }
  func.func @transform_0(%arg0: i32) -> (i32, i32) {
    %c0_i32 = arith.constant 0 : i32
    %c0_i32_0 = arith.constant 0 : i32
    return %arg0, %c0_i32 : i32, i32
  }
  func.func @transform_1(%arg0: i32) -> (i32, i32) {
    %c0_i32 = arith.constant 0 : i32
    %c0_i32_0 = arith.constant 0 : i32
    %c0_i32_1 = arith.constant 0 : i32
    return %c0_i32, %c0_i32_0 : i32, i32
  }
  func.func @transform_2(%arg0: i32) -> (i32, i32) {
    %c0_i32 = arith.constant 0 : i32
    %c0_i32_0 = arith.constant 0 : i32
    %c0_i32_1 = arith.constant 0 : i32
    return %c0_i32, %c0_i32_0 : i32, i32
  }
  func.func @transform_3(%arg0: i32) -> (i32, i32) {
    %c0_i32 = arith.constant 0 : i32
    %c0_i32_0 = arith.constant 0 : i32
    %c0_i32_1 = arith.constant 0 : i32
    return %c0_i32, %c0_i32_0 : i32, i32
  }
  func.func @transform_4(%arg0: i32) -> (i32, i32) {
    %c0_i32 = arith.constant 0 : i32
    %c0_i32_0 = arith.constant 0 : i32
    return %arg0, %c0_i32 : i32, i32
  }
}

</mosaic_0001>

<llo_original>
// kernel: _forward_impl.1
$region0: #{_forward_impl.1}
  #allocation0 [shape = 'u32[]', space=smem, size = 0x4, offset = 0x4, fixed_abs, tag = 'smem constant byte address 0x4 - core index']
  #allocation1 [shape = 'u32[144,128]{1,0:T(1,128)}', space=vmem, size = 0x12000, scoped, tag = 'internal scratch']
  %s0 = inlined_call_operand.hbm [shape: f32[8,32], index: 0, kind: input, shape index: {}]
  %s1 = inlined_call_operand.hbm [shape: bf16[288,512], index: 1, kind: input, shape index: {}]
  %s2 = inlined_call_operand.hbm [shape: bf16[512,128], index: 2, kind: input, shape index: {}]
  %s3 = inlined_call_operand.hbm [shape: f32[3,512], index: 3, kind: input, shape index: {}]
  %s4 = inlined_call_operand.vmem [shape: f32[8,128], index: 4, kind: output, shape index: {}]
  %s5 = sld [smem:[#allocation0]]
  $region42: #{_forward_impl.1} parent=0
    _
  %s7 = ssub.s32 1, %s5
  %s8 = scalar_select 0, %s7, %s5
  $region1: #{_forward_impl.1} parent=0
    #allocation2 [shape = 'u8[4096]{0}', space=vmem, size = 0x1000, scoped, tag = 'input window, operand 0, single buffered']
    #allocation3 [shape = 's32[1]{0}', space=sflag, size = 0x4, scoped, tag = 'scoped memory for _forward_impl.1']
    #allocation4 [shape = 'u8[294912]{0}', space=vmem, size = 0x48000, scoped, tag = 'input window, operand 1, single buffered']
    #allocation5 [shape = 's32[1]{0}', space=sflag, size = 0x4, scoped, tag = 'scoped memory for _forward_impl.1']
    #allocation6 [shape = 'u8[131072]{0}', space=vmem, size = 0x20000, scoped, tag = 'input window, operand 2, single buffered']
    #allocation7 [shape = 'u8[8192]{0}', space=vmem, size = 0x2000, scoped, tag = 'input window, operand 3, single buffered']
    #allocation8 [shape = 's32[1]{0}', space=sflag, size = 0x4, scoped, tag = 'scoped memory for _forward_impl.1']
    %9 = vsyncpa [#allocation3], 0
    %10 = vsyncpa [#allocation5], 0
    %11 = vsyncpa [#allocation8], 0
    // Predicated region
    $region2: #{_forward_impl.1} parent=1 // pred_check
      _
    $region3: #{_forward_impl.1} parent=1 // pred_check_branch
      %13 = sbr.rel (0) target = $region5
    $region4: #{_forward_impl.1} parent=1 // pred_region
      %s15 = ssub.s32 128, 128
      %16 = vsyncadd [#allocation3], %s15
      %s18 = sshll.u32 [#allocation2], 4
      %s19 = int_to_ptr.vmem [resolvable:$true] %s18
      %21 = dma.hbm_to_vmem [thread:$0]  %s0, 128, %s19, [#allocation3]
    $region5: #{_forward_impl.1} parent=1 // pred_fallthru
      _
    // Predicated region
    $region6: #{_forward_impl.1} parent=1 // pred_check
      _
    $region7: #{_forward_impl.1} parent=1 // pred_check_branch
      %23 = sbr.rel (0) target = $region9
    $region8: #{_forward_impl.1} parent=1 // pred_region
      %s25 = ssub.s32 9216, 9216
      %26 = vsyncadd [#allocation5], %s25
      %s27 = sshll.u32 [#allocation4], 4
      %s28 = int_to_ptr.vmem [resolvable:$true] %s27
      %33 = dma.hbm_to_vmem [thread:$0]  %s1, 9216, %s28, [#allocation5], 256, 256, 16
    $region9: #{_forward_impl.1} parent=1 // pred_fallthru
      _
    // Predicated region
    $region10: #{_forward_impl.1} parent=1 // pred_check
      _
    $region11: #{_forward_impl.1} parent=1 // pred_check_branch
      %35 = sbr.rel (0) target = $region13
    $region12: #{_forward_impl.1} parent=1 // pred_region
      %s37 = ssub.s32 4096, 4096
      %38 = vsyncadd [#allocation5], %s37
      %s39 = sshll.u32 [#allocation6], 4
      %s40 = int_to_ptr.vmem [resolvable:$true] %s39
      %45 = dma.hbm_to_vmem [thread:$0]  %s2, 4096, %s40, [#allocation5], 64, 64, 4
    $region13: #{_forward_impl.1} parent=1 // pred_fallthru
      _
    // Predicated region
    $region14: #{_forward_impl.1} parent=1 // pred_check
      _
    $region15: #{_forward_impl.1} parent=1 // pred_check_branch
      %47 = sbr.rel (0) target = $region17
    $region16: #{_forward_impl.1} parent=1 // pred_region
      %s49 = ssub.s32 256, 256
      %50 = vsyncadd [#allocation8], %s49
      %s52 = sshll.u32 [#allocation7], 4
      %s53 = int_to_ptr.vmem [resolvable:$true] %s52
      %55 = dma.hbm_to_vmem [thread:$0]  %s3, 256, %s53, [#allocation8]
    $region17: #{_forward_impl.1} parent=1 // pred_fallthru
      _
    // Predicated region
    $region18: #{_forward_impl.1} parent=1 // pred_check
      _
    $region19: #{_forward_impl.1} parent=1 // pred_check_branch
      %57 = sbr.rel (0) target = $region21
    $region20: #{_forward_impl.1} parent=1 // pred_region
      %58 = dma.done [#allocation3], 128
    $region21: #{_forward_impl.1} parent=1 // pred_fallthru
      _
    // Predicated region
    $region22: #{_forward_impl.1} parent=1 // pred_check
      _
    $region23: #{_forward_impl.1} parent=1 // pred_check_branch
      %60 = sbr.rel (0) target = $region25
    $region24: #{_forward_impl.1} parent=1 // pred_region
      %61 = dma.done [#allocation5], 9216
    $region25: #{_forward_impl.1} parent=1 // pred_fallthru
      _
    // Predicated region
    $region26: #{_forward_impl.1} parent=1 // pred_check
      _
    $region27: #{_forward_impl.1} parent=1 // pred_check_branch
      %63 = sbr.rel (0) target = $region29
    $region28: #{_forward_impl.1} parent=1 // pred_region
      %64 = dma.done [#allocation5], 4096
    $region29: #{_forward_impl.1} parent=1 // pred_fallthru
      _
    // Predicated region
    $region30: #{_forward_impl.1} parent=1 // pred_check
      _
    $region31: #{_forward_impl.1} parent=1 // pred_check_branch
      %66 = sbr.rel (0) target = $region33
    $region32: #{_forward_impl.1} parent=1 // pred_region
      %67 = dma.done [#allocation8], 256
    $region33: #{_forward_impl.1} parent=1 // pred_fallthru
      _
    %v69 = vld [vmem:[#allocation2] sm:$0xff]
    %v70 = vpack.c.bf16 %v69, %v69
    %v71 = vld [vmem:[#allocation4] sm:$0xff]
    %v72 = vld [vmem:[#allocation4 + $0x8] sm:$0xff]
    %v73 = vld [vmem:[#allocation4 + $0x10] sm:$0xff]
    %v74 = vld [vmem:[#allocation4 + $0x18] sm:$0xff]
    %v75 = vld [vmem:[#allocation4 + $0x20] sm:$0xff]
    %v76 = vld [vmem:[#allocation4 + $0x28] sm:$0xff]
    %v77 = vld [vmem:[#allocation4 + $0x30] sm:$0xff]
    %v78 = vld [vmem:[#allocation4 + $0x38] sm:$0xff]
    %v79 = vld [vmem:[#allocation4 + $0x40] sm:$0xff]
    %v80 = vld [vmem:[#allocation4 + $0x50] sm:$0xff]
    %v81 = vld [vmem:[#allocation4 + $0x60] sm:$0xff]
    %v82 = vld [vmem:[#allocation4 + $0x70] sm:$0xff]
    %v83 = vld [vmem:[#allocation4 + $0x80] sm:$0xff]
    %v84 = vld [vmem:[#allocation4 + $0x90] sm:$0xff]
    %v85 = vld [vmem:[#allocation4 + $0xa0] sm:$0xff]
    %v86 = vld [vmem:[#allocation4 + $0xb0] sm:$0xff]
    %v87 = vld [vmem:[#allocation4 + $0xc0] sm:$0xff]
    %v88 = vld [vmem:[#allocation4 + $0xd0] sm:$0xff]
    %v89 = vld [vmem:[#allocation4 + $0xe0] sm:$0xff]
    %v90 = vld [vmem:[#allocation4 + $0xf0] sm:$0xff]
    %v91 = vld [vmem:[#allocation4 + $0x100] sm:$0xff]
    %v92 = vld [vmem:[#allocation4 + $0x110] sm:$0xff]
    %v93 = vld [vmem:[#allocation4 + $0x120] sm:$0xff]
    %v94 = vld [vmem:[#allocation4 + $0x130] sm:$0xff]
    %v95 = vld [vmem:[#allocation4 + $0x140] sm:$0xff]
    %v96 = vld [vmem:[#allocation4 + $0x150] sm:$0xff]
    %v97 = vld [vmem:[#allocation4 + $0x160] sm:$0xff]
    %v98 = vld [vmem:[#allocation4 + $0x170] sm:$0xff]
    %v99 = vld [vmem:[#allocation4 + $0x180] sm:$0xff]
    %v100 = vld [vmem:[#allocation4 + $0x190] sm:$0xff]
    %v101 = vld [vmem:[#allocation4 + $0x1a0] sm:$0xff]
    %v102 = vld [vmem:[#allocation4 + $0x1b0] sm:$0xff]
    %v103 = vld [vmem:[#allocation4 + $0x1c0] sm:$0xff]
    %v104 = vld [vmem:[#allocation4 + $0x1d0] sm:$0xff]
    %v105 = vld [vmem:[#allocation4 + $0x1e0] sm:$0xff]
    %v106 = vld [vmem:[#allocation4 + $0x1f0] sm:$0xff]
    %v107 = vld [vmem:[#allocation4 + $0x200] sm:$0xff]
    %v108 = vld [vmem:[#allocation4 + $0x210] sm:$0xff]
    %v109 = vld [vmem:[#allocation4 + $0x220] sm:$0xff]
    %v110 = vld [vmem:[#allocation4 + $0x230] sm:$0xff]
    %v111 = vld [vmem:[#allocation4 + $0x48] sm:$0xff]
    %v112 = vld [vmem:[#allocation4 + $0x58] sm:$0xff]
    %v113 = vld [vmem:[#allocation4 + $0x68] sm:$0xff]
    %v114 = vld [vmem:[#allocation4 + $0x78] sm:$0xff]
    %v115 = vld [vmem:[#allocation4 + $0x88] sm:$0xff]
    %v116 = vld [vmem:[#allocation4 + $0x98] sm:$0xff]
    %v117 = vld [vmem:[#allocation4 + $0xa8] sm:$0xff]
    %v118 = vld [vmem:[#allocation4 + $0xb8] sm:$0xff]
    %v119 = vld [vmem:[#allocation4 + $0xc8] sm:$0xff]
    %v120 = vld [vmem:[#allocation4 + $0xd8] sm:$0xff]
    %v121 = vld [vmem:[#allocation4 + $0xe8] sm:$0xff]
    %v122 = vld [vmem:[#allocation4 + $0xf8] sm:$0xff]
    %v123 = vld [vmem:[#allocation4 + $0x108] sm:$0xff]
    %v124 = vld [vmem:[#allocation4 + $0x118] sm:$0xff]
    %v125 = vld [vmem:[#allocation4 + $0x128] sm:$0xff]
    %v126 = vld [vmem:[#allocation4 + $0x138] sm:$0xff]
    %v127 = vld [vmem:[#allocation4 + $0x148] sm:$0xff]
    %v128 = vld [vmem:[#allocation4 + $0x158] sm:$0xff]
    %v129 = vld [vmem:[#allocation4 + $0x168] sm:$0xff]
    %v130 = vld [vmem:[#allocation4 + $0x178] sm:$0xff]
    %v131 = vld [vmem:[#allocation4 + $0x188] sm:$0xff]
    %v132 = vld [vmem:[#allocation4 + $0x198] sm:$0xff]
    %v133 = vld [vmem:[#allocation4 + $0x1a8] sm:$0xff]
    %v134 = vld [vmem:[#allocation4 + $0x1b8] sm:$0xff]
    %v135 = vld [vmem:[#allocation4 + $0x1c8] sm:$0xff]
    %v136 = vld [vmem:[#allocation4 + $0x1d8] sm:$0xff]
    %v137 = vld [vmem:[#allocation4 + $0x1e8] sm:$0xff]
    %v138 = vld [vmem:[#allocation4 + $0x1f8] sm:$0xff]
    %v139 = vld [vmem:[#allocation4 + $0x208] sm:$0xff]
    %v140 = vld [vmem:[#allocation4 + $0x218] sm:$0xff]
    %v141 = vld [vmem:[#allocation4 + $0x228] sm:$0xff]
    %v142 = vld [vmem:[#allocation4 + $0x238] sm:$0xff]
    %v143 = vld [vmem:[#allocation7] ss:$4 sm:$0xf]
    %v145 = vlaneseq
    %v146 = vshrl.u32 %v145, 7
    %v147 = vsub.s32 0, %v146
    %v148 = vrot.slane %v143, %v147
    %v149 = vlaneseq
    %v150 = vshrl.u32 %v149, 7
    %v151 = vsub.s32 1, %v150
    %v152 = vrot.slane %v143, %v151
    %v153 = vlaneseq
    %v154 = vshrl.u32 %v153, 7
    %v155 = vsub.s32 2, %v154
    %v156 = vrot.slane %v143, %v155
    %v157 = vlaneseq
    %v158 = vshrl.u32 %v157, 7
    %v159 = vsub.s32 3, %v158
    %v160 = vrot.slane %v143, %v159
    %v173 = vunpack.c.l.b16 %v71
    %v174 = vunpack.c.h.b16 %v71
    %v175 = vunpack.c.l.b16 %v72
    %v176 = vunpack.c.h.b16 %v72
    %v177 = vunpack.c.l.b16 %v73
    %v178 = vunpack.c.h.b16 %v73
    %v179 = vunpack.c.l.b16 %v74
    %v180 = vunpack.c.h.b16 %v74
    %v181 = vunpack.c.l.b16 %v75
    %v182 = vunpack.c.h.b16 %v75
    %v183 = vunpack.c.l.b16 %v76
    %v184 = vunpack.c.h.b16 %v76
    %v185 = vunpack.c.l.b16 %v77
    %v186 = vunpack.c.h.b16 %v77
    %v187 = vunpack.c.l.b16 %v78
    %v188 = vunpack.c.h.b16 %v78
    %v189 = vpack.c.b16 %v177, %v173
    %v190 = vpack.c.b16 %v178, %v174
    %v191 = vpack.c.b16 %v179, %v175
    %v192 = vpack.c.b16 %v180, %v176
    %v193 = vpack.c.b16 %v185, %v181
    %v194 = vpack.c.b16 %v186, %v182
    %v195 = vpack.c.b16 %v187, %v183
    %v196 = vpack.c.b16 %v188, %v184
    %vm205 = vcmask 261120
    %v207 = vsel %vm205, %v70, 0
    %209 = vmatprep.subr.bf16.mxu0 0
    %210 = vmatpush1.bf16.msra.mxu0 0
    %211 = vmatprep.subr.bf16.mxu0 0
    %212 = vmatpush1.bf16.msra.mxu0 0
    %213 = vmatprep.subr.bf16.mxu0 0
    %214 = vmatpush1.bf16.msra.mxu0 0
    %215 = vmatprep.subr.bf16.mxu0 0
    %216 = vmatpush1.bf16.msra.mxu0 0
    %217 = vmatprep.subr.bf16.mxu0 0
    %218 = vmatpush1.bf16.msra.mxu0 0
    %219 = vmatprep.subr.bf16.mxu0 0
    %220 = vmatpush1.bf16.msra.mxu0 0
    %221 = vmatprep.subr.bf16.mxu0 %v194
    %222 = vmatpush1.bf16.msra.mxu0 %v193
    %223 = vmatprep.subr.bf16.mxu0 %v190
    %224 = vmatpush1.bf16.msra.mxu0 %v189
    %225 = vmatprep.subr.bf16.mxu0 0
    %226 = vmatpush2.bf16.msra.mxu0 0
    %227 = vmatprep.subr.bf16.mxu0 0
    %228 = vmatpush2.bf16.msra.mxu0 0
    %229 = vmatprep.subr.bf16.mxu0 0
    %230 = vmatpush2.bf16.msra.mxu0 0
    %231 = vmatprep.subr.bf16.mxu0 0
    %232 = vmatpush2.bf16.msra.mxu0 0
    %233 = vmatprep.subr.bf16.mxu0 0
    %234 = vmatpush2.bf16.msra.mxu0 0
    %235 = vmatprep.subr.bf16.mxu0 0
    %236 = vmatpush2.bf16.msra.mxu0 0
    %237 = vmatprep.subr.bf16.mxu0 0
    %238 = vmatpush2.bf16.msra.mxu0 0
    %239 = vmatprep.subr.bf16.mxu0 0
    %240 = vmatpush2.bf16.msra.mxu0 0
    %241 = vmatprep.mubr.bf16.mxu0 0
    %242 = vmatmul.mubr.bf16.gmra.mxu0 %v207
    %v243 = vpop.f32.mrf.mxu0
    %v244 = vadd.f32 %v148, %v243
    %v245 = vpop.f32.mrf.mxu0
    %v246 = vadd.f32 %v152, %v245
    %v247 = vpop.f32.mrf.mxu0
    %v248 = vpop.f32.mrf.mxu0
    %249 = vdwg.mxu0
    %250 = vmatprep.subr.bf16.mxu0 0
    %251 = vmatpush1.bf16.msra.mxu0 0
    %252 = vmatprep.subr.bf16.mxu0 0
    %253 = vmatpush1.bf16.msra.mxu0 0
    %254 = vmatprep.subr.bf16.mxu0 0
    %255 = vmatpush1.bf16.msra.mxu0 0
    %256 = vmatprep.subr.bf16.mxu0 0
    %257 = vmatpush1.bf16.msra.mxu0 0
    %258 = vmatprep.subr.bf16.mxu0 0
    %259 = vmatpush1.bf16.msra.mxu0 0
    %260 = vmatprep.subr.bf16.mxu0 0
    %261 = vmatpush1.bf16.msra.mxu0 0
    %262 = vmatprep.subr.bf16.mxu0 %v196
    %263 = vmatpush1.bf16.msra.mxu0 %v195
    %264 = vmatprep.subr.bf16.mxu0 %v192
    %265 = vmatpush1.bf16.msra.mxu0 %v191
    %266 = vmatprep.subr.bf16.mxu0 0
    %267 = vmatpush2.bf16.msra.mxu0 0
    %268 = vmatprep.subr.bf16.mxu0 0
    %269 = vmatpush2.bf16.msra.mxu0 0
    %270 = vmatprep.subr.bf16.mxu0 0
    %271 = vmatpush2.bf16.msra.mxu0 0
    %272 = vmatprep.subr.bf16.mxu0 0
    %273 = vmatpush2.bf16.msra.mxu0 0
    %274 = vmatprep.subr.bf16.mxu0 0
    %275 = vmatpush2.bf16.msra.mxu0 0
    %276 = vmatprep.subr.bf16.mxu0 0
    %277 = vmatpush2.bf16.msra.mxu0 0
    %278 = vmatprep.subr.bf16.mxu0 0
    %279 = vmatpush2.bf16.msra.mxu0 0
    %280 = vmatprep.subr.bf16.mxu0 0
    %281 = vmatpush2.bf16.msra.mxu0 0
    %282 = vmatprep.mubr.bf16.mxu0 0
    %283 = vmatmul.mubr.bf16.gmra.mxu0 %v207
    %v284 = vpop.f32.mrf.mxu0
    %v285 = vadd.f32 %v156, %v284
    %v286 = vpop.f32.mrf.mxu0
    %v287 = vadd.f32 %v160, %v286
    %v288 = vpop.f32.mrf.mxu0
    %v289 = vpop.f32.mrf.mxu0
    %290 = vdwg.mxu0
    %v291 = vtanh.pop %v244
    %v292 = vtanh.pop %v246
    %v293 = vtanh.pop %v285
    %v294 = vtanh.pop %v287
    %v295 = vpack.c.bf16 %v291, %v291
    %v296 = vpack.c.bf16 %v292, %v292
    %v297 = vpack.c.bf16 %v293, %v293
    %v298 = vpack.c.bf16 %v294, %v294
    %s299 = scalar_lea.vmem [#allocation7], 1
    %v300 = vld [vmem:[%s299] ss:$4 sm:$0x3]
    %v302 = vlaneseq
    %v303 = vshrl.u32 %v302, 7
    %v304 = vsub.s32 0, %v303
    %v305 = vrot.slane %v300, %v304
    %v306 = vlaneseq
    %v307 = vshrl.u32 %v306, 7
    %v308 = vsub.s32 1, %v307
    %v309 = vrot.slane %v300, %v308
    %v344 = vunpack.c.l.b16 %v79
    %v345 = vunpack.c.h.b16 %v79
    %v346 = vunpack.c.l.b16 %v80
    %v347 = vunpack.c.h.b16 %v80
    %v348 = vunpack.c.l.b16 %v81
    %v349 = vunpack.c.h.b16 %v81
    %v350 = vunpack.c.l.b16 %v82
    %v351 = vunpack.c.h.b16 %v82
    %v352 = vunpack.c.l.b16 %v83
    %v353 = vunpack.c.h.b16 %v83
    %v354 = vunpack.c.l.b16 %v84
    %v355 = vunpack.c.h.b16 %v84
    %v356 = vunpack.c.l.b16 %v85
    %v357 = vunpack.c.h.b16 %v85
    %v358 = vunpack.c.l.b16 %v86
    %v359 = vunpack.c.h.b16 %v86
    %v360 = vunpack.c.l.b16 %v87
    %v361 = vunpack.c.h.b16 %v87
    %v362 = vunpack.c.l.b16 %v88
    %v363 = vunpack.c.h.b16 %v88
    %v364 = vunpack.c.l.b16 %v89
    %v365 = vunpack.c.h.b16 %v89
    %v366 = vunpack.c.l.b16 %v90
    %v367 = vunpack.c.h.b16 %v90
    %v368 = vunpack.c.l.b16 %v91
    %v369 = vunpack.c.h.b16 %v91
    %v370 = vunpack.c.l.b16 %v92
    %v371 = vunpack.c.h.b16 %v92
    %v372 = vunpack.c.l.b16 %v93
    %v373 = vunpack.c.h.b16 %v93
    %v374 = vunpack.c.l.b16 %v94
    %v375 = vunpack.c.h.b16 %v94
    %v376 = vunpack.c.l.b16 %v95
    %v377 = vunpack.c.h.b16 %v95
    %v378 = vunpack.c.l.b16 %v96
    %v379 = vunpack.c.h.b16 %v96
    %v380 = vunpack.c.l.b16 %v97
    %v381 = vunpack.c.h.b16 %v97
    %v382 = vunpack.c.l.b16 %v98
    %v383 = vunpack.c.h.b16 %v98
    %v384 = vunpack.c.l.b16 %v99
    %v385 = vunpack.c.h.b16 %v99
    %v386 = vunpack.c.l.b16 %v100
    %v387 = vunpack.c.h.b16 %v100
    %v388 = vunpack.c.l.b16 %v101
    %v389 = vunpack.c.h.b16 %v101
    %v390 = vunpack.c.l.b16 %v102
    %v391 = vunpack.c.h.b16 %v102
    %v392 = vunpack.c.l.b16 %v103
    %v393 = vunpack.c.h.b16 %v103
    %v394 = vunpack.c.l.b16 %v104
    %v395 = vunpack.c.h.b16 %v104
    %v396 = vunpack.c.l.b16 %v105
    %v397 = vunpack.c.h.b16 %v105
    %v398 = vunpack.c.l.b16 %v106
    %v399 = vunpack.c.h.b16 %v106
    %v400 = vunpack.c.l.b16 %v107
    %v401 = vunpack.c.h.b16 %v107
    %v402 = vunpack.c.l.b16 %v108
    %v403 = vunpack.c.h.b16 %v108
    %v404 = vunpack.c.l.b16 %v109
    %v405 = vunpack.c.h.b16 %v109
    %v406 = vunpack.c.l.b16 %v110
    %v407 = vunpack.c.h.b16 %v110
    %v408 = vpack.c.b16 %v346, %v344
    %v409 = vpack.c.b16 %v347, %v345
    %v410 = vpack.c.b16 %v350, %v348
    %v411 = vpack.c.b16 %v351, %v349
    %v412 = vpack.c.b16 %v354, %v352
    %v413 = vpack.c.b16 %v355, %v353
    %v414 = vpack.c.b16 %v358, %v356
    %v415 = vpack.c.b16 %v359, %v357
    %v416 = vpack.c.b16 %v362, %v360
    %v417 = vpack.c.b16 %v363, %v361
    %v418 = vpack.c.b16 %v366, %v364
    %v419 = vpack.c.b16 %v367, %v365
    %v420 = vpack.c.b16 %v370, %v368
    %v421 = vpack.c.b16 %v371, %v369
    %v422 = vpack.c.b16 %v374, %v372
    %v423 = vpack.c.b16 %v375, %v373
    %v424 = vpack.c.b16 %v378, %v376
    %v425 = vpack.c.b16 %v379, %v377
    %v426 = vpack.c.b16 %v382, %v380
    %v427 = vpack.c.b16 %v383, %v381
    %v428 = vpack.c.b16 %v386, %v384
    %v429 = vpack.c.b16 %v387, %v385
    %v430 = vpack.c.b16 %v390, %v388
    %v431 = vpack.c.b16 %v391, %v389
    %v432 = vpack.c.b16 %v394, %v392
    %v433 = vpack.c.b16 %v395, %v393
    %v434 = vpack.c.b16 %v398, %v396
    %v435 = vpack.c.b16 %v399, %v397
    %v436 = vpack.c.b16 %v402, %v400
    %v437 = vpack.c.b16 %v403, %v401
    %v438 = vpack.c.b16 %v406, %v404
    %v439 = vpack.c.b16 %v407, %v405
    %472 = vmatprep.subr.bf16.mxu0 %v423
    %473 = vmatpush1.bf16.msra.mxu0 %v422
    %474 = vmatprep.subr.bf16.mxu0 %v421
    %475 = vmatpush1.bf16.msra.mxu0 %v420
    %476 = vmatprep.subr.bf16.mxu0 %v419
    %477 = vmatpush1.bf16.msra.mxu0 %v418
    %478 = vmatprep.subr.bf16.mxu0 %v417
    %479 = vmatpush1.bf16.msra.mxu0 %v416
    %480 = vmatprep.subr.bf16.mxu0 %v415
    %481 = vmatpush1.bf16.msra.mxu0 %v414
    %482 = vmatprep.subr.bf16.mxu0 %v413
    %483 = vmatpush1.bf16.msra.mxu0 %v412
    %484 = vmatprep.subr.bf16.mxu0 %v411
    %485 = vmatpush1.bf16.msra.mxu0 %v410
    %486 = vmatprep.subr.bf16.mxu0 %v409
    %487 = vmatpush1.bf16.msra.mxu0 %v408
    %488 = vmatprep.subr.bf16.mxu0 %v439
    %489 = vmatpush2.bf16.msra.mxu0 %v438
    %490 = vmatprep.subr.bf16.mxu0 %v437
    %491 = vmatpush2.bf16.msra.mxu0 %v436
    %492 = vmatprep.subr.bf16.mxu0 %v435
    %493 = vmatpush2.bf16.msra.mxu0 %v434
    %494 = vmatprep.subr.bf16.mxu0 %v433
    %495 = vmatpush2.bf16.msra.mxu0 %v432
    %496 = vmatprep.subr.bf16.mxu0 %v431
    %497 = vmatpush2.bf16.msra.mxu0 %v430
    %498 = vmatprep.subr.bf16.mxu0 %v429
    %499 = vmatpush2.bf16.msra.mxu0 %v428
    %500 = vmatprep.subr.bf16.mxu0 %v427
    %501 = vmatpush2.bf16.msra.mxu0 %v426
    %502 = vmatprep.subr.bf16.mxu0 %v425
    %503 = vmatpush2.bf16.msra.mxu0 %v424
    %504 = vmatprep.mubr.bf16.mxu0 %v296
    %505 = vmatmul.mubr.bf16.gmra.mxu0 %v295
    %v506 = vpop.f32.mrf.mxu0
    %v507 = vadd.f32 %v305, %v506
    %v508 = vpop.f32.mrf.mxu0
    %v509 = vadd.f32 %v309, %v508
    %v510 = vpop.f32.mrf.mxu0
    %v511 = vpop.f32.mrf.mxu0
    %512 = vdwg.mxu0
    %v513 = vtanh.pop %v507
    %v514 = vtanh.pop %v509
    %v515 = vpack.c.bf16 %v513, %v513
    %v516 = vpack.c.bf16 %v514, %v514
    %s517 = scalar_lea.vmem [#allocation7], 9
    %v518 = vld [vmem:[%s517] ss:$4 sm:$0x3]
    %v520 = vlaneseq
    %v521 = vshrl.u32 %v520, 7
    %v522 = vsub.s32 0, %v521
    %v523 = vrot.slane %v518, %v522
    %v524 = vlaneseq
    %v525 = vshrl.u32 %v524, 7
    %v526 = vsub.s32 1, %v525
    %v527 = vrot.slane %v518, %v526
    %v562 = vunpack.c.l.b16 %v111
    %v563 = vunpack.c.h.b16 %v111
    %v564 = vunpack.c.l.b16 %v112
    %v565 = vunpack.c.h.b16 %v112
    %v566 = vunpack.c.l.b16 %v113
    %v567 = vunpack.c.h.b16 %v113
    %v568 = vunpack.c.l.b16 %v114
    %v569 = vunpack.c.h.b16 %v114
    %v570 = vunpack.c.l.b16 %v115
    %v571 = vunpack.c.h.b16 %v115
    %v572 = vunpack.c.l.b16 %v116
    %v573 = vunpack.c.h.b16 %v116
    %v574 = vunpack.c.l.b16 %v117
    %v575 = vunpack.c.h.b16 %v117
    %v576 = vunpack.c.l.b16 %v118
    %v577 = vunpack.c.h.b16 %v118
    %v578 = vunpack.c.l.b16 %v119
    %v579 = vunpack.c.h.b16 %v119
    %v580 = vunpack.c.l.b16 %v120
    %v581 = vunpack.c.h.b16 %v120
    %v582 = vunpack.c.l.b16 %v121
    %v583 = vunpack.c.h.b16 %v121
    %v584 = vunpack.c.l.b16 %v122
    %v585 = vunpack.c.h.b16 %v122
    %v586 = vunpack.c.l.b16 %v123
    %v587 = vunpack.c.h.b16 %v123
    %v588 = vunpack.c.l.b16 %v124
    %v589 = vunpack.c.h.b16 %v124
    %v590 = vunpack.c.l.b16 %v125
    %v591 = vunpack.c.h.b16 %v125
    %v592 = vunpack.c.l.b16 %v126
    %v593 = vunpack.c.h.b16 %v126
    %v594 = vunpack.c.l.b16 %v127
    %v595 = vunpack.c.h.b16 %v127
    %v596 = vunpack.c.l.b16 %v128
    %v597 = vunpack.c.h.b16 %v128
    %v598 = vunpack.c.l.b16 %v129
    %v599 = vunpack.c.h.b16 %v129
    %v600 = vunpack.c.l.b16 %v130
    %v601 = vunpack.c.h.b16 %v130
    %v602 = vunpack.c.l.b16 %v131
    %v603 = vunpack.c.h.b16 %v131
    %v604 = vunpack.c.l.b16 %v132
    %v605 = vunpack.c.h.b16 %v132
    %v606 = vunpack.c.l.b16 %v133
    %v607 = vunpack.c.h.b16 %v133
    %v608 = vunpack.c.l.b16 %v134
    %v609 = vunpack.c.h.b16 %v134
    %v610 = vunpack.c.l.b16 %v135
    %v611 = vunpack.c.h.b16 %v135
    %v612 = vunpack.c.l.b16 %v136
    %v613 = vunpack.c.h.b16 %v136
    %v614 = vunpack.c.l.b16 %v137
    %v615 = vunpack.c.h.b16 %v137
    %v616 = vunpack.c.l.b16 %v138
    %v617 = vunpack.c.h.b16 %v138
    %v618 = vunpack.c.l.b16 %v139
    %v619 = vunpack.c.h.b16 %v139
    %v620 = vunpack.c.l.b16 %v140
    %v621 = vunpack.c.h.b16 %v140
    %v622 = vunpack.c.l.b16 %v141
    %v623 = vunpack.c.h.b16 %v141
    %v624 = vunpack.c.l.b16 %v142
    %v625 = vunpack.c.h.b16 %v142
    %v626 = vpack.c.b16 %v564, %v562
    %v627 = vpack.c.b16 %v565, %v563
    %v628 = vpack.c.b16 %v568, %v566
    %v629 = vpack.c.b16 %v569, %v567
    %v630 = vpack.c.b16 %v572, %v570
    %v631 = vpack.c.b16 %v573, %v571
    %v632 = vpack.c.b16 %v576, %v574
    %v633 = vpack.c.b16 %v577, %v575
    %v634 = vpack.c.b16 %v580, %v578
    %v635 = vpack.c.b16 %v581, %v579
    %v636 = vpack.c.b16 %v584, %v582
    %v637 = vpack.c.b16 %v585, %v583
    %v638 = vpack.c.b16 %v588, %v586
    %v639 = vpack.c.b16 %v589, %v587
    %v640 = vpack.c.b16 %v592, %v590
    %v641 = vpack.c.b16 %v593, %v591
    %v642 = vpack.c.b16 %v596, %v594
    %v643 = vpack.c.b16 %v597, %v595
    %v644 = vpack.c.b16 %v600, %v598
    %v645 = vpack.c.b16 %v601, %v599
    %v646 = vpack.c.b16 %v604, %v602
    %v647 = vpack.c.b16 %v605, %v603
    %v648 = vpack.c.b16 %v608, %v606
    %v649 = vpack.c.b16 %v609, %v607
    %v650 = vpack.c.b16 %v612, %v610
    %v651 = vpack.c.b16 %v613, %v611
    %v652 = vpack.c.b16 %v616, %v614
    %v653 = vpack.c.b16 %v617, %v615
    %v654 = vpack.c.b16 %v620, %v618
    %v655 = vpack.c.b16 %v621, %v619
    %v656 = vpack.c.b16 %v624, %v622
    %v657 = vpack.c.b16 %v625, %v623
    %690 = vmatprep.subr.bf16.mxu0 %v641
    %691 = vmatpush1.bf16.msra.mxu0 %v640
    %692 = vmatprep.subr.bf16.mxu0 %v639
    %693 = vmatpush1.bf16.msra.mxu0 %v638
    %694 = vmatprep.subr.bf16.mxu0 %v637
    %695 = vmatpush1.bf16.msra.mxu0 %v636
    %696 = vmatprep.subr.bf16.mxu0 %v635
    %697 = vmatpush1.bf16.msra.mxu0 %v634
    %698 = vmatprep.subr.bf16.mxu0 %v633
    %699 = vmatpush1.bf16.msra.mxu0 %v632
    %700 = vmatprep.subr.bf16.mxu0 %v631
    %701 = vmatpush1.bf16.msra.mxu0 %v630
    %702 = vmatprep.subr.bf16.mxu0 %v629
    %703 = vmatpush1.bf16.msra.mxu0 %v628
    %704 = vmatprep.subr.bf16.mxu0 %v627
    %705 = vmatpush1.bf16.msra.mxu0 %v626
    %706 = vmatprep.subr.bf16.mxu0 %v657
    %707 = vmatpush2.bf16.msra.mxu0 %v656
    %708 = vmatprep.subr.bf16.mxu0 %v655
    %709 = vmatpush2.bf16.msra.mxu0 %v654
    %710 = vmatprep.subr.bf16.mxu0 %v653
    %711 = vmatpush2.bf16.msra.mxu0 %v652
    %712 = vmatprep.subr.bf16.mxu0 %v651
    %713 = vmatpush2.bf16.msra.mxu0 %v650
    %714 = vmatprep.subr.bf16.mxu0 %v649
    %715 = vmatpush2.bf16.msra.mxu0 %v648
    %716 = vmatprep.subr.bf16.mxu0 %v647
    %717 = vmatpush2.bf16.msra.mxu0 %v646
    %718 = vmatprep.subr.bf16.mxu0 %v645
    %719 = vmatpush2.bf16.msra.mxu0 %v644
    %720 = vmatprep.subr.bf16.mxu0 %v643
    %721 = vmatpush2.bf16.msra.mxu0 %v642
    %722 = vmatprep.mubr.bf16.mxu0 %v298
    %723 = vmatmul.mubr.bf16.gmra.mxu0 %v297
    %v724 = vpop.f32.mrf.mxu0
    %v725 = vadd.f32 %v523, %v724
    %v726 = vpop.f32.mrf.mxu0
    %v727 = vadd.f32 %v527, %v726
    %v728 = vpop.f32.mrf.mxu0
    %v729 = vpop.f32.mrf.mxu0
    %730 = vdwg.mxu0
    %v731 = vtanh.pop %v725
    %v732 = vtanh.pop %v727
    %v733 = vpack.c.bf16 %v731, %v731
    %v734 = vpack.c.bf16 %v732, %v732
    %v735 = vld [vmem:[#allocation6] sm:$0xf]
    %v736 = vld [vmem:[#allocation6 + $0x4] sm:$0xf]
    %v737 = vld [vmem:[#allocation6 + $0x8] sm:$0xf]
    %v738 = vld [vmem:[#allocation6 + $0xc] sm:$0xf]
    %v739 = vld [vmem:[#allocation6 + $0x10] sm:$0xf]
    %v740 = vld [vmem:[#allocation6 + $0x14] sm:$0xf]
    %v741 = vld [vmem:[#allocation6 + $0x18] sm:$0xf]
    %v742 = vld [vmem:[#allocation6 + $0x1c] sm:$0xf]
    %v743 = vld [vmem:[#allocation6 + $0x20] sm:$0xf]
    %v744 = vld [vmem:[#allocation6 + $0x24] sm:$0xf]
    %v745 = vld [vmem:[#allocation6 + $0x28] sm:$0xf]
    %v746 = vld [vmem:[#allocation6 + $0x2c] sm:$0xf]
    %v747 = vld [vmem:[#allocation6 + $0x30] sm:$0xf]
    %v748 = vld [vmem:[#allocation6 + $0x34] sm:$0xf]
    %v749 = vld [vmem:[#allocation6 + $0x38] sm:$0xf]
    %v750 = vld [vmem:[#allocation6 + $0x3c] sm:$0xf]
    %v751 = vld [vmem:[#allocation6 + $0x40] sm:$0xf]
    %v752 = vld [vmem:[#allocation6 + $0x44] sm:$0xf]
    %v753 = vld [vmem:[#allocation6 + $0x48] sm:$0xf]
    %v754 = vld [vmem:[#allocation6 + $0x4c] sm:$0xf]
    %v755 = vld [vmem:[#allocation6 + $0x50] sm:$0xf]
    %v756 = vld [vmem:[#allocation6 + $0x54] sm:$0xf]
    %v757 = vld [vmem:[#allocation6 + $0x58] sm:$0xf]
    %v758 = vld [vmem:[#allocation6 + $0x5c] sm:$0xf]
    %v759 = vld [vmem:[#allocation6 + $0x60] sm:$0xf]
    %v760 = vld [vmem:[#allocation6 + $0x64] sm:$0xf]
    %v761 = vld [vmem:[#allocation6 + $0x68] sm:$0xf]
    %v762 = vld [vmem:[#allocation6 + $0x6c] sm:$0xf]
    %v763 = vld [vmem:[#allocation6 + $0x70] sm:$0xf]
    %v764 = vld [vmem:[#allocation6 + $0x74] sm:$0xf]
    %v765 = vld [vmem:[#allocation6 + $0x78] sm:$0xf]
    %v766 = vld [vmem:[#allocation6 + $0x7c] sm:$0xf]
    %v767 = vld [vmem:[#allocation6 + $0x80] sm:$0xf]
    %v768 = vld [vmem:[#allocation6 + $0x84] sm:$0xf]
    %v769 = vld [vmem:[#allocation6 + $0x88] sm:$0xf]
    %v770 = vld [vmem:[#allocation6 + $0x8c] sm:$0xf]
    %v771 = vld [vmem:[#allocation6 + $0x90] sm:$0xf]
    %v772 = vld [vmem:[#allocation6 + $0x94] sm:$0xf]
    %v773 = vld [vmem:[#allocation6 + $0x98] sm:$0xf]
    %v774 = vld [vmem:[#allocation6 + $0x9c] sm:$0xf]
    %v775 = vld [vmem:[#allocation6 + $0xa0] sm:$0xf]
    %v776 = vld [vmem:[#allocation6 + $0xa4] sm:$0xf]
    %v777 = vld [vmem:[#allocation6 + $0xa8] sm:$0xf]
    %v778 = vld [vmem:[#allocation6 + $0xac] sm:$0xf]
    %v779 = vld [vmem:[#allocation6 + $0xb0] sm:$0xf]
    %v780 = vld [vmem:[#allocation6 + $0xb4] sm:$0xf]
    %v781 = vld [vmem:[#allocation6 + $0xb8] sm:$0xf]
    %v782 = vld [vmem:[#allocation6 + $0xbc] sm:$0xf]
    %v783 = vld [vmem:[#allocation6 + $0xc0] sm:$0xf]
    %v784 = vld [vmem:[#allocation6 + $0xc4] sm:$0xf]
    %v785 = vld [vmem:[#allocation6 + $0xc8] sm:$0xf]
    %v786 = vld [vmem:[#allocation6 + $0xcc] sm:$0xf]
    %v787 = vld [vmem:[#allocation6 + $0xd0] sm:$0xf]
    %v788 = vld [vmem:[#allocation6 + $0xd4] sm:$0xf]
    %v789 = vld [vmem:[#allocation6 + $0xd8] sm:$0xf]
    %v790 = vld [vmem:[#allocation6 + $0xdc] sm:$0xf]
    %v791 = vld [vmem:[#allocation6 + $0xe0] sm:$0xf]
    %v792 = vld [vmem:[#allocation6 + $0xe4] sm:$0xf]
    %v793 = vld [vmem:[#allocation6 + $0xe8] sm:$0xf]
    %v794 = vld [vmem:[#allocation6 + $0xec] sm:$0xf]
    %v795 = vld [vmem:[#allocation6 + $0xf0] sm:$0xf]
    %v796 = vld [vmem:[#allocation6 + $0xf4] sm:$0xf]
    %v797 = vld [vmem:[#allocation6 + $0xf8] sm:$0xf]
    %v798 = vld [vmem:[#allocation6 + $0xfc] sm:$0xf]
    %v831 = vunpack.c.l.b16 %v767
    %v832 = vunpack.c.l.b16 %v768
    %v833 = vunpack.c.l.b16 %v769
    %v834 = vunpack.c.l.b16 %v770
    %v835 = vunpack.c.l.b16 %v771
    %v836 = vunpack.c.l.b16 %v772
    %v837 = vunpack.c.l.b16 %v773
    %v838 = vunpack.c.l.b16 %v774
    %v839 = vunpack.c.l.b16 %v775
    %v840 = vunpack.c.l.b16 %v776
    %v841 = vunpack.c.l.b16 %v777
    %v842 = vunpack.c.l.b16 %v778
    %v843 = vunpack.c.l.b16 %v779
    %v844 = vunpack.c.l.b16 %v780
    %v845 = vunpack.c.l.b16 %v781
    %v846 = vunpack.c.l.b16 %v782
    %v847 = vunpack.c.l.b16 %v783
    %v848 = vunpack.c.l.b16 %v784
    %v849 = vunpack.c.l.b16 %v785
    %v850 = vunpack.c.l.b16 %v786
    %v851 = vunpack.c.l.b16 %v787
    %v852 = vunpack.c.l.b16 %v788
    %v853 = vunpack.c.l.b16 %v789
    %v854 = vunpack.c.l.b16 %v790
    %v855 = vunpack.c.l.b16 %v791
    %v856 = vunpack.c.l.b16 %v792
    %v857 = vunpack.c.l.b16 %v793
    %v858 = vunpack.c.l.b16 %v794
    %v859 = vunpack.c.l.b16 %v795
    %v860 = vunpack.c.l.b16 %v796
    %v861 = vunpack.c.l.b16 %v797
    %v862 = vunpack.c.l.b16 %v798
    %v863 = vpack.c.b16 %v832, %v831
    %v864 = vpack.c.b16 %v834, %v833
    %v865 = vpack.c.b16 %v836, %v835
    %v866 = vpack.c.b16 %v838, %v837
    %v867 = vpack.c.b16 %v840, %v839
    %v868 = vpack.c.b16 %v842, %v841
    %v869 = vpack.c.b16 %v844, %v843
    %v870 = vpack.c.b16 %v846, %v845
    %v871 = vpack.c.b16 %v848, %v847
    %v872 = vpack.c.b16 %v850, %v849
    %v873 = vpack.c.b16 %v852, %v851
    %v874 = vpack.c.b16 %v854, %v853
    %v875 = vpack.c.b16 %v856, %v855
    %v876 = vpack.c.b16 %v858, %v857
    %v877 = vpack.c.b16 %v860, %v859
    %v878 = vpack.c.b16 %v862, %v861
    %895 = vmatprep.subr.bf16.mxu0 0
    %896 = vmatpush1.bf16.msra.mxu0 %v870
    %897 = vmatprep.subr.bf16.mxu0 0
    %898 = vmatpush1.bf16.msra.mxu0 %v869
    %899 = vmatprep.subr.bf16.mxu0 0
    %900 = vmatpush1.bf16.msra.mxu0 %v868
    %901 = vmatprep.subr.bf16.mxu0 0
    %902 = vmatpush1.bf16.msra.mxu0 %v867
    %903 = vmatprep.subr.bf16.mxu0 0
    %904 = vmatpush1.bf16.msra.mxu0 %v866
    %905 = vmatprep.subr.bf16.mxu0 0
    %906 = vmatpush1.bf16.msra.mxu0 %v865
    %907 = vmatprep.subr.bf16.mxu0 0
    %908 = vmatpush1.bf16.msra.mxu0 %v864
    %909 = vmatprep.subr.bf16.mxu0 0
    %910 = vmatpush1.bf16.msra.mxu0 %v863
    %911 = vmatprep.subr.bf16.mxu0 0
    %912 = vmatpush2.bf16.msra.mxu0 %v878
    %913 = vmatprep.subr.bf16.mxu0 0
    %914 = vmatpush2.bf16.msra.mxu0 %v877
    %915 = vmatprep.subr.bf16.mxu0 0
    %916 = vmatpush2.bf16.msra.mxu0 %v876
    %917 = vmatprep.subr.bf16.mxu0 0
    %918 = vmatpush2.bf16.msra.mxu0 %v875
    %919 = vmatprep.subr.bf16.mxu0 0
    %920 = vmatpush2.bf16.msra.mxu0 %v874
    %921 = vmatprep.subr.bf16.mxu0 0
    %922 = vmatpush2.bf16.msra.mxu0 %v873
    %923 = vmatprep.subr.bf16.mxu0 0
    %924 = vmatpush2.bf16.msra.mxu0 %v872
    %925 = vmatprep.subr.bf16.mxu0 0
    %926 = vmatpush2.bf16.msra.mxu0 %v871
    %927 = vmatprep.mubr.bf16.mxu0 %v734
    %928 = vmatmul.mubr.bf16.gmra.mxu0 %v733
    %v929 = vpop.f32.mrf.mxu0
    %v930 = vadd.f32 0.0, %v929
    %v931 = vpop.f32.mrf.mxu0
    %v932 = vpop.f32.mrf.mxu0
    %v933 = vpop.f32.mrf.mxu0
    %934 = vdwg.mxu0
    %v967 = vunpack.c.l.b16 %v735
    %v968 = vunpack.c.l.b16 %v736
    %v969 = vunpack.c.l.b16 %v737
    %v970 = vunpack.c.l.b16 %v738
    %v971 = vunpack.c.l.b16 %v739
    %v972 = vunpack.c.l.b16 %v740
    %v973 = vunpack.c.l.b16 %v741
    %v974 = vunpack.c.l.b16 %v742
    %v975 = vunpack.c.l.b16 %v743
    %v976 = vunpack.c.l.b16 %v744
    %v977 = vunpack.c.l.b16 %v745
    %v978 = vunpack.c.l.b16 %v746
    %v979 = vunpack.c.l.b16 %v747
    %v980 = vunpack.c.l.b16 %v748
    %v981 = vunpack.c.l.b16 %v749
    %v982 = vunpack.c.l.b16 %v750
    %v983 = vunpack.c.l.b16 %v751
    %v984 = vunpack.c.l.b16 %v752
    %v985 = vunpack.c.l.b16 %v753
    %v986 = vunpack.c.l.b16 %v754
    %v987 = vunpack.c.l.b16 %v755
    %v988 = vunpack.c.l.b16 %v756
    %v989 = vunpack.c.l.b16 %v757
    %v990 = vunpack.c.l.b16 %v758
    %v991 = vunpack.c.l.b16 %v759
    %v992 = vunpack.c.l.b16 %v760
    %v993 = vunpack.c.l.b16 %v761
    %v994 = vunpack.c.l.b16 %v762
    %v995 = vunpack.c.l.b16 %v763
    %v996 = vunpack.c.l.b16 %v764
    %v997 = vunpack.c.l.b16 %v765
    %v998 = vunpack.c.l.b16 %v766
    %v999 = vpack.c.b16 %v968, %v967
    %v1000 = vpack.c.b16 %v970, %v969
    %v1001 = vpack.c.b16 %v972, %v971
    %v1002 = vpack.c.b16 %v974, %v973
    %v1003 = vpack.c.b16 %v976, %v975
    %v1004 = vpack.c.b16 %v978, %v977
    %v1005 = vpack.c.b16 %v980, %v979
    %v1006 = vpack.c.b16 %v982, %v981
    %v1007 = vpack.c.b16 %v984, %v983
    %v1008 = vpack.c.b16 %v986, %v985
    %v1009 = vpack.c.b16 %v988, %v987
    %v1010 = vpack.c.b16 %v990, %v989
    %v1011 = vpack.c.b16 %v992, %v991
    %v1012 = vpack.c.b16 %v994, %v993
    %v1013 = vpack.c.b16 %v996, %v995
    %v1014 = vpack.c.b16 %v998, %v997
    %1031 = vmatprep.subr.bf16.mxu0 0
    %1032 = vmatpush1.bf16.msra.mxu0 %v1006
    %1033 = vmatprep.subr.bf16.mxu0 0
    %1034 = vmatpush1.bf16.msra.mxu0 %v1005
    %1035 = vmatprep.subr.bf16.mxu0 0
    %1036 = vmatpush1.bf16.msra.mxu0 %v1004
    %1037 = vmatprep.subr.bf16.mxu0 0
    %1038 = vmatpush1.bf16.msra.mxu0 %v1003
    %1039 = vmatprep.subr.bf16.mxu0 0
    %1040 = vmatpush1.bf16.msra.mxu0 %v1002
    %1041 = vmatprep.subr.bf16.mxu0 0
    %1042 = vmatpush1.bf16.msra.mxu0 %v1001
    %1043 = vmatprep.subr.bf16.mxu0 0
    %1044 = vmatpush1.bf16.msra.mxu0 %v1000
    %1045 = vmatprep.subr.bf16.mxu0 0
    %1046 = vmatpush1.bf16.msra.mxu0 %v999
    %1047 = vmatprep.subr.bf16.mxu0 0
    %1048 = vmatpush2.bf16.msra.mxu0 %v1014
    %1049 = vmatprep.subr.bf16.mxu0 0
    %1050 = vmatpush2.bf16.msra.mxu0 %v1013
    %1051 = vmatprep.subr.bf16.mxu0 0
    %1052 = vmatpush2.bf16.msra.mxu0 %v1012
    %1053 = vmatprep.subr.bf16.mxu0 0
    %1054 = vmatpush2.bf16.msra.mxu0 %v1011
    %1055 = vmatprep.subr.bf16.mxu0 0
    %1056 = vmatpush2.bf16.msra.mxu0 %v1010
    %1057 = vmatprep.subr.bf16.mxu0 0
    %1058 = vmatpush2.bf16.msra.mxu0 %v1009
    %1059 = vmatprep.subr.bf16.mxu0 0
    %1060 = vmatpush2.bf16.msra.mxu0 %v1008
    %1061 = vmatprep.subr.bf16.mxu0 0
    %1062 = vmatpush2.bf16.msra.mxu0 %v1007
    %1063 = vmatprep.mubr.bf16.mxu0 %v516
    %1064 = vmatmul.mubr.bf16.gmra.mxu0 %v515
    %v1065 = vpop.f32.mrf.mxu0
    %v1066 = vadd.f32 %v930, %v1065
    %v1067 = vpop.f32.mrf.mxu0
    %v1068 = vpop.f32.mrf.mxu0
    %v1069 = vpop.f32.mrf.mxu0
    %1070 = vdwg.mxu0
    %v1071 = vld [vmem:[#allocation7 + $0x2] sm:$0x1]
    %v1072 = vlaneseq
    %v1073 = vshrl.u32 %v1072, 7
    %v1074 = vsub.s32 0, %v1073
    %v1075 = vrot.slane %v1071, %v1074
    %v1076 = vadd.f32 %v1066, %v1075
    %v1077 = vlaneseq
    %v1078 = vand.u32 %v1077, 127
    %vm1079 = vcmp.lt.s32.totalorder %v1078, 4
    %v1080 = vsel %vm1079, %v1076, -1e+30
    %1081 = vmax.xlane.f32.xlu0 %v1080
    %v1082 = vpop.xlane.xlu0 %1081
    %v1083 = vsub.f32 %v1080, %v1082
    %v1084 = vmul.f32 %v1083, 1.442695
    %v1085 = vpow.pop %v1084
    %1086 = vadd.xlane.f32.xlu0 %v1085
    %v1087 = vpop.xlane.xlu0 %1086
    %v1088 = vrcp.pop %v1087
    %v1089 = vmul.f32 %v1087, %v1088
    %v1090 = vsub.f32 2.0, %v1089
    %v1091 = vmul.f32 %v1088, %v1090
    %v1092 = vmul.f32 %v1087, %v1091
    %v1093 = vsub.f32 2.0, %v1092
    %v1094 = vmul.f32 %v1091, %v1093
    %v1095 = vmul.f32 %v1085, %v1094
    %vm1096 = vcmp.eq.s32.totalorder %v1078, 4
    %v1097 = vsel %vm1096, %v1076, 0.0
    %v1098 = vsel %vm1079, %v1095, %v1097
    %1099 = vst [vmem:[%s4] sm:$0xff] %v1098
    // Predicated region
    $region34: #{_forward_impl.1} parent=1 // pred_check
      _
    $region35: #{_forward_impl.1} parent=1 // pred_check_branch
      %1101 = sbr.rel (0) target = $region37
    $region36: #{_forward_impl.1} parent=1 // pred_region
      _
    $region37: #{_forward_impl.1} parent=1 // pred_fallthru
      _
    // Predicated region
    $region38: #{_forward_impl.1} parent=1 // pred_check
      _
    $region39: #{_forward_impl.1} parent=1 // pred_check_branch
      %1103 = sbr.rel (0) target = $region41
    $region40: #{_forward_impl.1} parent=1 // pred_region
      _
    $region41: #{_forward_impl.1} parent=1 // pred_fallthru
      _
    %1104 = vsyncpa [#allocation3], 1
    %1105 = vsyncpa [#allocation5], 1
    %1106 = vsyncpa [#allocation8], 1

</llo_original>
